<compile_context>
chip_gen: v7x
topology: tpu7x:2x2x1
jax: 0.10.0
libtpu: 0.0.40
codegen_flags: <defaults>
</compile_context>

<pallas_src>
import functools
import math

import jax
import jax.numpy as jnp
import numpy as np
from jax import lax
from jax.experimental import pallas as pl
from jax.experimental.pallas import tpu as pltpu


def _mhsd_kernel(q_ref, wqk_ref, his_ref, logsoft_ref, soft_ref, *,
                 norm_factor, tb, n, k):
    """One grid step processes TB batch elements.

    q_ref   : (TB*N, D)  this step's nodes, flattened over (batch, node)
    wqk_ref : (D, 2K)    [W_query | W_key], resident across the grid
    his_ref : (TB, 1)    int32 masked-node index per batch row (-1 => no mask)
    outputs : (TB, N)    log_softmax / softmax over the node axis
    """
    x = q_ref[...]                                                     # (TB*N, D)

    # Fused projection: a single MXU matmul produces both Q and K.
    qk = jnp.dot(x, wqk_ref[...], preferred_element_type=jnp.float32)  # (TB*N, 2K)
    qk = qk.reshape(tb, n, 2 * k)
    qm = qk[..., :k]                                                   # (TB, N, K)
    km = qk[..., k:]                                                   # (TB, N, K)

    # Batched scores, contracting the last dims (no transpose of an MXU result).
    scores = jnp.einsum("bik,bjk->bij", qm, km,
                        preferred_element_type=jnp.float32)            # (TB, N, N)

    # Max over keys, then tanh clipping.  norm_factor > 0 commutes with max, so it
    # is applied once to the (TB, N) max instead of to the full (TB, N, N) scores.
    comp = jnp.tanh(norm_factor * jnp.max(scores, axis=-1)) * 10.0     # (TB, N)

    # History mask: compatibility[b, his[b]] = -inf (his == -1 matches no column).
    col = lax.broadcasted_iota(jnp.int32, comp.shape, 1)
    comp = jnp.where(col == his_ref[...], -jnp.inf, comp)

    # Numerically stable log_softmax; softmax = exp(log_softmax) (no divide).
    m = jnp.max(comp, axis=-1, keepdims=True)
    z = comp - m
    s = jnp.sum(jnp.exp(z), axis=-1, keepdims=True)
    logsoft = z - jnp.log(s)

    logsoft_ref[...] = logsoft.astype(logsoft_ref.dtype)
    soft_ref[...] = jnp.exp(logsoft).astype(soft_ref.dtype)


def _pick_tb(batch):
    """Batch rows per grid step: whole batch for small B, else a multiple-of-8 tile."""
    if batch <= 64:
        return batch
    for tb in (64, 32, 16, 8):
        if batch % tb == 0:
            return tb
    return batch


def multi_head_sel_decoder(q, w_query, w_key, his=None, tb=None):
    """q: (B, N, D) f32; w_query/w_key: (D, K) f32; his: (B,) int indices or None."""
    B, N, D = q.shape
    K = w_query.shape[-1]
    norm_factor = 1.0 / math.sqrt(K)

    if tb is None:
        tb = _pick_tb(B)
    assert B % tb == 0, "batch tile must divide the batch size"

    if his is None:
        his_arr = jnp.full((B, 1), -1, dtype=jnp.int32)   # -1 never matches a column
    else:
        his_arr = his.astype(jnp.int32).reshape(B, 1)

    w_qk = jnp.concatenate([w_query, w_key], axis=-1)     # (D, 2K), built once
    q2 = q.reshape(B * N, D)                              # contiguous reshape, free

    kernel = functools.partial(_mhsd_kernel, norm_factor=norm_factor,
                               tb=tb, n=N, k=K)

    grid_spec = pltpu.PrefetchScalarGridSpec(
        num_scalar_prefetch=0,
        grid=(B // tb,),
        in_specs=[
            pl.BlockSpec((tb * N, D), lambda i: (i, 0)),   # q, TB batch rows / step
            pl.BlockSpec((D, 2 * K), lambda i: (0, 0)),    # [Wq | Wk], resident
            pl.BlockSpec((tb, 1), lambda i: (i, 0)),       # his indices
        ],
        out_specs=[
            pl.BlockSpec((tb, N), lambda i: (i, 0)),       # log_softmax
            pl.BlockSpec((tb, N), lambda i: (i, 0)),       # softmax
        ],
    )

    return pl.pallas_call(
        kernel,
        out_shape=(
            jax.ShapeDtypeStruct((B, N), jnp.float32),
            jax.ShapeDtypeStruct((B, N), jnp.float32),
        ),
        grid_spec=grid_spec,
        compiler_params=pltpu.CompilerParams(dimension_semantics=("parallel",)),
    )(q2, w_qk, his_arr)


def _reference(q, w_query, w_key, his):
    """Pure-JAX mirror of the PyTorch forward (n_heads = 1)."""
    K = w_query.shape[-1]
    norm = 1.0 / math.sqrt(K)
    Q = jnp.einsum("bnd,dk->bnk", q, w_query)
    Kk = jnp.einsum("bnd,dk->bnk", q, w_key)
    scores = norm * jnp.einsum("bnk,bmk->bnm", Q, Kk)
    comp = jnp.tanh(jnp.max(scores, axis=-1)) * 10.0
    if his is not None:
        comp = comp.at[jnp.arange(q.shape[0]), his].set(-jnp.inf)
    return jax.nn.log_softmax(comp, axis=-1), jax.nn.softmax(comp, axis=-1)


if __name__ == "__main__":
    B, N, D = 2, 8, 32           # batch, graph_size (= n_query), input_dim
    embed_dim = D
    key_dim = embed_dim // 1     # n_heads = 1  ->  key_dim = val_dim = embed_dim

    key = jax.random.PRNGKey(0)
    k_q, k_wq, k_wk, k_his = jax.random.split(key, 4)

    # Parameter init mirroring init_parameters(): U(-stdv, stdv), stdv = 1/sqrt(key_dim)
    stdv = 1.0 / math.sqrt(key_dim)
    w_query = jax.random.uniform(k_wq, (D, key_dim), minval=-stdv, maxval=stdv,
                                 dtype=jnp.float32)
    w_key = jax.random.uniform(k_wk, (D, key_dim), minval=-stdv, maxval=stdv,
                               dtype=jnp.float32)

    q = jax.random.normal(k_q, (B, N, D), dtype=jnp.float32)
    his = jax.random.randint(k_his, (B,), 0, N, dtype=jnp.int32)

    log_soft, soft = multi_head_sel_decoder(q, w_query, w_key, his)
    jax.block_until_ready((log_soft, soft))

    ref_ls, ref_s = _reference(q, w_query, w_key, his)

    ls, rls = np.asarray(log_soft), np.asarray(ref_ls)
    assert np.allclose(np.asarray(soft), np.asarray(ref_s), atol=1e-5)
    assert np.array_equal(np.isneginf(ls), np.isneginf(rls))
    finite = np.isfinite(rls)
    assert np.allclose(ls[finite], rls[finite], atol=1e-5)

    print("KERNEL_OK")
</pallas_src>

<mosaic_0001>
module attributes {stable_mosaic.version = 11 : i64} {
  func.func @_mhsd_kernel(%arg0: i32, %arg1: memref<16x32xf32, #tpu.memory_space<vmem>>, %arg2: memref<32x64xf32, #tpu.memory_space<vmem>>, %arg3: memref<2x1xi32, #tpu.memory_space<vmem>>, %arg4: memref<2x8xf32, #tpu.memory_space<vmem>>, %arg5: memref<2x8xf32, #tpu.memory_space<vmem>>) attributes {dimension_semantics = [#tpu.dimension_semantics<parallel>], iteration_bounds = array<i64: 1>, scalar_prefetch = 0 : i64, scratch_operands = 0 : i64, tpu.core_type = #tpu.core_type<tc>, window_params = [{transform_indices = @transform_0, window_bounds = array<i64: 16, 32>}, {pipeline_mode = #tpu.pipeline_mode<synchronous>, transform_indices = @transform_1, window_bounds = array<i64: 32, 64>}, {transform_indices = @transform_2, window_bounds = array<i64: 2, 1>}, {transform_indices = @transform_3, window_bounds = array<i64: 2, 8>}, {transform_indices = @transform_4, window_bounds = array<i64: 2, 8>}]} {
    %c0 = arith.constant 0 : index
    %c0_0 = arith.constant 0 : index
    %0 = vector.load %arg1[%c0, %c0_0] : memref<16x32xf32, #tpu.memory_space<vmem>>, vector<16x32xf32>
    %c0_1 = arith.constant 0 : index
    %c0_2 = arith.constant 0 : index
    %1 = vector.load %arg2[%c0_1, %c0_2] : memref<32x64xf32, #tpu.memory_space<vmem>>, vector<32x64xf32>
    %cst = arith.constant dense<0.000000e+00> : vector<16x64xf32>
    %2 = tpu.matmul %0, %1, %cst {dimension_numbers = #tpu.dot_dimension_numbers<[1], [0], [0], [1], [0, 0, 1, 1], [], []>} : vector<16x32xf32>, vector<32x64xf32>, vector<16x64xf32> -> vector<16x64xf32>
    %3 = vector.shape_cast %2 : vector<16x64xf32> to vector<2x8x64xf32>
    %4 = vector.extract_strided_slice %3 {offsets = [0, 0, 0], sizes = [2, 8, 32], strides = [1, 1, 1]} : vector<2x8x64xf32> to vector<2x8x32xf32>
    %5 = vector.extract_strided_slice %3 {offsets = [0, 0, 32], sizes = [2, 8, 32], strides = [1, 1, 1]} : vector<2x8x64xf32> to vector<2x8x32xf32>
    "tpu.trace_start"() <{level = 10 : i32, message = "bik,bjk->bij"}> : () -> ()
    %cst_3 = arith.constant dense<0.000000e+00> : vector<2x8x8xf32>
    %6 = tpu.matmul %4, %5, %cst_3 {dimension_numbers = #tpu.dot_dimension_numbers<[2], [2], [1], [1], [0, 0, 0, 1, 1, 1], [0], [0]>} : vector<2x8x32xf32>, vector<2x8x32xf32>, vector<2x8x8xf32> -> vector<2x8x8xf32>
    "tpu.trace_stop"() : () -> ()
    %cst_4 = arith.constant dense<0xFF800000> : vector<2x8xf32>
    %7 = vector.multi_reduction <maximumf>, %6, %cst_4 [2] : vector<2x8x8xf32> to vector<2x8xf32>
    %cst_5 = arith.constant 0.176776692 : f32
    %8 = vector.broadcast %cst_5 : f32 to vector<2x8xf32>
    %9 = arith.mulf %8, %7 : vector<2x8xf32>
    %10 = math.tanh %9 : vector<2x8xf32>
    %cst_6 = arith.constant 1.000000e+01 : f32
    %11 = vector.broadcast %cst_6 : f32 to vector<2x8xf32>
    %12 = arith.mulf %10, %11 : vector<2x8xf32>
    %13 = tpu.iota {dimensions = array<i32: 1>} : vector<2x8xi32>
    %c0_7 = arith.constant 0 : index
    %c0_8 = arith.constant 0 : index
    %14 = vector.load %arg3[%c0_7, %c0_8] : memref<2x1xi32, #tpu.memory_space<vmem>>, vector<2x1xi32>
    %15 = vector.broadcast %14 : vector<2x1xi32> to vector<2x8xi32>
    %16 = arith.cmpi eq, %13, %15 : vector<2x8xi32>
    %cst_9 = arith.constant 0xFF800000 : f32
    %17 = vector.broadcast %cst_9 : f32 to vector<2x8xf32>
    %18 = arith.select %16, %17, %12 : vector<2x8xi1>, vector<2x8xf32>
    %cst_10 = arith.constant dense<0xFF800000> : vector<2xf32>
    %19 = vector.multi_reduction <maximumf>, %18, %cst_10 [1] : vector<2x8xf32> to vector<2xf32>
    %20 = vector.shape_cast %19 : vector<2xf32> to vector<2x1xf32>
    %21 = vector.broadcast %20 : vector<2x1xf32> to vector<2x8xf32>
    %22 = arith.subf %18, %21 : vector<2x8xf32>
    %23 = math.exp %22 : vector<2x8xf32>
    %cst_11 = arith.constant dense<0.000000e+00> : vector<2xf32>
    %24 = vector.multi_reduction <add>, %23, %cst_11 [1] : vector<2x8xf32> to vector<2xf32>
    %25 = vector.shape_cast %24 : vector<2xf32> to vector<2x1xf32>
    %26 = math.log %25 : vector<2x1xf32>
    %27 = vector.broadcast %26 : vector<2x1xf32> to vector<2x8xf32>
    %28 = arith.subf %22, %27 : vector<2x8xf32>
    %c0_12 = arith.constant 0 : index
    %c0_13 = arith.constant 0 : index
    %29 = vector.load %arg4[%c0_12, %c0_13] : memref<2x8xf32, #tpu.memory_space<vmem>>, vector<2x8xf32>
    tpu.vector_store %arg4[%c0_12, %c0_13], %28 {strides = array<i32>} : memref<2x8xf32, #tpu.memory_space<vmem>>, vector<2x8xf32>,
    %30 = math.exp %28 : vector<2x8xf32>
    %c0_14 = arith.constant 0 : index
    %c0_15 = arith.constant 0 : index
    %31 = vector.load %arg5[%c0_14, %c0_15] : memref<2x8xf32, #tpu.memory_space<vmem>>, vector<2x8xf32>
    tpu.vector_store %arg5[%c0_14, %c0_15], %30 {strides = array<i32>} : memref<2x8xf32, #tpu.memory_space<vmem>>, vector<2x8xf32>,
    return
  }
  func.func @transform_0(%arg0: i32) -> (i32, i32) {
    %c0_i32 = arith.constant 0 : i32
    %c0_i32_0 = arith.constant 0 : i32
    return %arg0, %c0_i32 : i32, i32
  }
  func.func @transform_1(%arg0: i32) -> (i32, i32) {
    %c0_i32 = arith.constant 0 : i32
    %c0_i32_0 = arith.constant 0 : i32
    %c0_i32_1 = arith.constant 0 : i32
    return %c0_i32, %c0_i32_0 : i32, i32
  }
  func.func @transform_2(%arg0: i32) -> (i32, i32) {
    %c0_i32 = arith.constant 0 : i32
    %c0_i32_0 = arith.constant 0 : i32
    return %arg0, %c0_i32 : i32, i32
  }
  func.func @transform_3(%arg0: i32) -> (i32, i32) {
    %c0_i32 = arith.constant 0 : i32
    %c0_i32_0 = arith.constant 0 : i32
    return %arg0, %c0_i32 : i32, i32
  }
  func.func @transform_4(%arg0: i32) -> (i32, i32) {
    %c0_i32 = arith.constant 0 : i32
    %c0_i32_0 = arith.constant 0 : i32
    return %arg0, %c0_i32 : i32, i32
  }
}

</mosaic_0001>

<llo_original>
// kernel: tpu_custom_call.1
$region0: #{tpu_custom_call.1}
  #allocation0 [shape = 'u32[]', space=smem, size = 0x4, offset = 0x4, fixed_abs, tag = 'smem constant byte address 0x4 - core index']
  #allocation1 [shape = 'u32[144,128]{1,0:T(1,128)}', space=vmem, size = 0x12000, scoped, tag = 'internal scratch']
  %s0 = inlined_call_operand.hbm [shape: f32[16,32], index: 0, kind: input, shape index: {}]
  %s1 = inlined_call_operand.hbm [shape: f32[32,64], index: 1, kind: input, shape index: {}]
  %s2 = inlined_call_operand.vmem [shape: s32[2,1], index: 2, kind: input, shape index: {}]
  %s3 = inlined_call_operand.hbm [shape: f32[2,8], index: 3, kind: output, shape index: {0}]
  %s4 = inlined_call_operand.hbm [shape: f32[2,8], index: 4, kind: output, shape index: {1}]
  %5 = xla_tuple %s3, %s4
  %s6 = sld [smem:[#allocation0]]
  $region38: #{tpu_custom_call.1} parent=0
    _
  %s8 = ssub.s32 1, %s6
  %s9 = scalar_select 0, %s8, %s6
  $region1: #{tpu_custom_call.1} parent=0
    #allocation2 [shape = 'u8[8192]{0}', space=vmem, size = 0x2000, scoped, tag = 'input window, operand 0, single buffered']
    #allocation3 [shape = 's32[1]{0}', space=sflag, size = 0x4, scoped, tag = 'scoped memory for tpu_custom_call.1']
    #allocation4 [shape = 's32[1]{0}', space=sflag, size = 0x4, scoped, tag = 'scoped memory for tpu_custom_call.1']
    #allocation5 [shape = 'u8[16384]{0}', space=vmem, size = 0x4000, scoped, tag = 'input window, operand 1, single buffered']
    #allocation6 [shape = 's32[1]{0}', space=sflag, size = 0x4, scoped, tag = 'scoped memory for tpu_custom_call.1']
    #allocation7 [shape = 'u8[1024]{0}', space=vmem, size = 0x400, scoped, tag = 'output window, operand 0, single buffered']
    #allocation8 [shape = 'u8[1024]{0}', space=vmem, size = 0x400, scoped, tag = 'output window, operand 1, single buffered']
    #allocation9 [shape = 's32[1]{0}', space=sflag, size = 0x4, scoped, tag = 'scoped memory for tpu_custom_call.1']
    %10 = vsyncpa [#allocation3], 0
    %11 = vsyncpa [#allocation6], 0
    %12 = vsyncpa [#allocation4], 0
    %13 = vsyncpa [#allocation9], 0
    // Predicated region
    $region2: #{tpu_custom_call.1} parent=1 // pred_check
      _
    $region3: #{tpu_custom_call.1} parent=1 // pred_check_branch
      %15 = sbr.rel (0) target = $region5
    $region4: #{tpu_custom_call.1} parent=1 // pred_region
      %s17 = ssub.s32 256, 256
      %18 = vsyncadd [#allocation3], %s17
      %s19 = sshll.u32 [#allocation2], 4
      %s20 = int_to_ptr.vmem [resolvable:$true] %s19
      %25 = dma.hbm_to_vmem [thread:$0]  %s0, 256, %s20, [#allocation3], 128, 128, 8
    $region5: #{tpu_custom_call.1} parent=1 // pred_fallthru
      _
    // Predicated region
    $region6: #{tpu_custom_call.1} parent=1 // pred_check
      _
    $region7: #{tpu_custom_call.1} parent=1 // pred_check_branch
      %27 = sbr.rel (0) target = $region9
    $region8: #{tpu_custom_call.1} parent=1 // pred_region
      %s29 = ssub.s32 512, 512
      %30 = vsyncadd [#allocation6], %s29
      %s31 = sshll.u32 [#allocation5], 4
      %s32 = int_to_ptr.vmem [resolvable:$true] %s31
      %37 = dma.hbm_to_vmem [thread:$0]  %s1, 512, %s32, [#allocation6], 128, 128, 8
    $region9: #{tpu_custom_call.1} parent=1 // pred_fallthru
      _
    // Predicated region
    $region10: #{tpu_custom_call.1} parent=1 // pred_check
      _
    $region11: #{tpu_custom_call.1} parent=1 // pred_check_branch
      %39 = sbr.rel (0) target = $region13
    $region12: #{tpu_custom_call.1} parent=1 // pred_region
      _
    $region13: #{tpu_custom_call.1} parent=1 // pred_fallthru
      _
    // Predicated region
    $region14: #{tpu_custom_call.1} parent=1 // pred_check
      _
    $region15: #{tpu_custom_call.1} parent=1 // pred_check_branch
      %41 = sbr.rel (0) target = $region17
    $region16: #{tpu_custom_call.1} parent=1 // pred_region
      %42 = dma.done [#allocation3], 256
    $region17: #{tpu_custom_call.1} parent=1 // pred_fallthru
      _
    // Predicated region
    $region18: #{tpu_custom_call.1} parent=1 // pred_check
      _
    $region19: #{tpu_custom_call.1} parent=1 // pred_check_branch
      %44 = sbr.rel (0) target = $region21
    $region20: #{tpu_custom_call.1} parent=1 // pred_region
      %45 = dma.done [#allocation6], 512
    $region21: #{tpu_custom_call.1} parent=1 // pred_fallthru
      _
    %v46 = vld [vmem:[#allocation2] sm:$0xff]
    %v47 = vld [vmem:[#allocation2 + $0x8] sm:$0xff]
    %v48 = vld [vmem:[#allocation5] sm:$0xff]
    %v49 = vld [vmem:[#allocation5 + $0x8] sm:$0xff]
    %v50 = vld [vmem:[#allocation5 + $0x10] sm:$0xff]
    %v51 = vld [vmem:[#allocation5 + $0x18] sm:$0xff]
    %vm52 = vcmask 261120
    %v54 = vsel %vm52, %v46, 0
    %v57 = vsel %vm52, %v47, 0
    %59 = vmatprep.subr.mxu0 0.0
    %60 = vmatpush1.msra.mxu0 %v48
    %61 = vmatprep.subr.mxu0 0.0
    %62 = vmatpush1.msra.mxu0 %v49
    %63 = vmatprep.subr.mxu0 0.0
    %64 = vmatpush1.msra.mxu0 %v50
    %65 = vmatprep.subr.mxu0 0.0
    %66 = vmatpush1.msra.mxu0 %v51
    %67 = vmatprep.subr.mxu0 0.0
    %68 = vmatpush1.msra.mxu0 0.0
    %69 = vmatprep.subr.mxu0 0.0
    %70 = vmatpush1.msra.mxu0 0.0
    %71 = vmatprep.subr.mxu0 0.0
    %72 = vmatpush1.msra.mxu0 0.0
    %73 = vmatprep.subr.mxu0 0.0
    %74 = vmatpush1.msra.mxu0 0.0
    %75 = vmatprep.subr.mxu0 0.0
    %76 = vmatpush1.msra.mxu0 0.0
    %77 = vmatprep.subr.mxu0 0.0
    %78 = vmatpush1.msra.mxu0 0.0
    %79 = vmatprep.subr.mxu0 0.0
    %80 = vmatpush1.msra.mxu0 0.0
    %81 = vmatprep.subr.mxu0 0.0
    %82 = vmatpush1.msra.mxu0 0.0
    %83 = vmatprep.subr.mxu0 0.0
    %84 = vmatpush1.msra.mxu0 0.0
    %85 = vmatprep.subr.mxu0 0.0
    %86 = vmatpush1.msra.mxu0 0.0
    %87 = vmatprep.subr.mxu0 0.0
    %88 = vmatpush1.msra.mxu0 0.0
    %89 = vmatprep.subr.mxu0 0.0
    %90 = vmatpush1.msra.mxu0 0.0
    %91 = vmatprep.subr.mxu0 0.0
    %92 = vmatpush1.msra.mxu0 0.0
    %93 = vmatprep.subr.mxu0 0.0
    %94 = vmatpush1.msra.mxu0 0.0
    %95 = vmatprep.subr.mxu0 0.0
    %96 = vmatpush1.msra.mxu0 0.0
    %97 = vmatprep.subr.mxu0 0.0
    %98 = vmatpush1.msra.mxu0 0.0
    %99 = vmatprep.subr.mxu0 0.0
    %100 = vmatpush1.msra.mxu0 0.0
    %101 = vmatprep.subr.mxu0 0.0
    %102 = vmatpush1.msra.mxu0 0.0
    %103 = vmatprep.subr.mxu0 0.0
    %104 = vmatpush1.msra.mxu0 0.0
    %105 = vmatprep.subr.mxu0 0.0
    %106 = vmatpush1.msra.mxu0 0.0
    %107 = vmatprep.subr.mxu0 0.0
    %108 = vmatpush1.msra.mxu0 0.0
    %109 = vmatprep.subr.mxu0 0.0
    %110 = vmatpush1.msra.mxu0 0.0
    %111 = vmatprep.subr.mxu0 0.0
    %112 = vmatpush1.msra.mxu0 0.0
    %113 = vmatprep.subr.mxu0 0.0
    %114 = vmatpush1.msra.mxu0 0.0
    %115 = vmatprep.subr.mxu0 0.0
    %116 = vmatpush1.msra.mxu0 0.0
    %117 = vmatprep.subr.mxu0 0.0
    %118 = vmatpush1.msra.mxu0 0.0
    %119 = vmatprep.subr.mxu0 0.0
    %120 = vmatpush1.msra.mxu0 0.0
    %121 = vmatprep.subr.mxu0 0.0
    %122 = vmatpush1.msra.mxu0 0.0
    %123 = vmatprep.mubr.f32.mxu0 0.0
    %124 = vmatmul.mubr.f32.gmra.mrb[0].mxu0 %v54
    %v125 = vpop.f32.mrb[0].mxu0
    %v126 = vadd.f32 0.0, %v125
    %v127 = vpop.f32.mrb[0].mxu0
    %128 = vmatprep.mubr.f32.mxu0 0.0
    %129 = vmatmul.mubr.f32.gmra.mrb[0].mxu0 %v57
    %v130 = vpop.f32.mrb[0].mxu0
    %v131 = vadd.f32 0.0, %v130
    %v132 = vpop.f32.mrb[0].mxu0
    %133 = vdwg.mxu0
    %135 = vrot.lane.b32.xlu0 %v126, 96
    %v136 = vpop.permute.xlu0 %135
    %v137 = vsel %vm52, %v126, 0
    %v139 = vsel %vm52, %v136, 0
    %141 = vmatprep.subr.mxu0 0.0
    %142 = vmatpush1.xpose.msra.mxu0 %v139
    %143 = vmatprep.subr.mxu0 0.0
    %144 = vmatpush1.xpose.msra.mxu0 0.0
    %145 = vmatprep.subr.mxu0 0.0
    %146 = vmatpush1.xpose.msra.mxu0 0.0
    %147 = vmatprep.subr.mxu0 0.0
    %148 = vmatpush1.xpose.msra.mxu0 0.0
    %149 = vmatprep.subr.mxu0 0.0
    %150 = vmatpush1.xpose.msra.mxu0 0.0
    %151 = vmatprep.subr.mxu0 0.0
    %152 = vmatpush1.xpose.msra.mxu0 0.0
    %153 = vmatprep.subr.mxu0 0.0
    %154 = vmatpush1.xpose.msra.mxu0 0.0
    %155 = vmatprep.subr.mxu0 0.0
    %156 = vmatpush1.xpose.msra.mxu0 0.0
    %157 = vmatprep.subr.mxu0 0.0
    %158 = vmatpush1.xpose.msra.mxu0 0.0
    %159 = vmatprep.subr.mxu0 0.0
    %160 = vmatpush1.xpose.msra.mxu0 0.0
    %161 = vmatprep.subr.mxu0 0.0
    %162 = vmatpush1.xpose.msra.mxu0 0.0
    %163 = vmatprep.subr.mxu0 0.0
    %164 = vmatpush1.xpose.msra.mxu0 0.0
    %165 = vmatprep.subr.mxu0 0.0
    %166 = vmatpush1.xpose.msra.mxu0 0.0
    %167 = vmatprep.subr.mxu0 0.0
    %168 = vmatpush1.xpose.msra.mxu0 0.0
    %169 = vmatprep.subr.mxu0 0.0
    %170 = vmatpush1.xpose.msra.mxu0 0.0
    %171 = vmatprep.subr.mxu0 0.0
    %172 = vmatpush1.xpose.msra.mxu0 0.0
    %173 = vmatprep.subr.mxu0 0.0
    %174 = vmatpush1.xpose.msra.mxu0 0.0
    %175 = vmatprep.subr.mxu0 0.0
    %176 = vmatpush1.xpose.msra.mxu0 0.0
    %177 = vmatprep.subr.mxu0 0.0
    %178 = vmatpush1.xpose.msra.mxu0 0.0
    %179 = vmatprep.subr.mxu0 0.0
    %180 = vmatpush1.xpose.msra.mxu0 0.0
    %181 = vmatprep.subr.mxu0 0.0
    %182 = vmatpush1.xpose.msra.mxu0 0.0
    %183 = vmatprep.subr.mxu0 0.0
    %184 = vmatpush1.xpose.msra.mxu0 0.0
    %185 = vmatprep.subr.mxu0 0.0
    %186 = vmatpush1.xpose.msra.mxu0 0.0
    %187 = vmatprep.subr.mxu0 0.0
    %188 = vmatpush1.xpose.msra.mxu0 0.0
    %189 = vmatprep.subr.mxu0 0.0
    %190 = vmatpush1.xpose.msra.mxu0 0.0
    %191 = vmatprep.subr.mxu0 0.0
    %192 = vmatpush1.xpose.msra.mxu0 0.0
    %193 = vmatprep.subr.mxu0 0.0
    %194 = vmatpush1.xpose.msra.mxu0 0.0
    %195 = vmatprep.subr.mxu0 0.0
    %196 = vmatpush1.xpose.msra.mxu0 0.0
    %197 = vmatprep.subr.mxu0 0.0
    %198 = vmatpush1.xpose.msra.mxu0 0.0
    %199 = vmatprep.subr.mxu0 0.0
    %200 = vmatpush1.xpose.msra.mxu0 0.0
    %201 = vmatprep.subr.mxu0 0.0
    %202 = vmatpush1.xpose.msra.mxu0 0.0
    %203 = vmatprep.subr.mxu0 0.0
    %204 = vmatpush1.xpose.msra.mxu0 0.0
    %205 = vmatprep.mubr.f32.mxu0 0.0
    %206 = vmatmul.mubr.f32.gmra.mrb[0].mxu0 %v137
    %v207 = vpop.f32.mrb[0].mxu0
    %v208 = vadd.f32 0.0, %v207
    %v209 = vpop.f32.mrb[0].mxu0
    %210 = vdwg.mxu0
    %212 = vrot.lane.b32.xlu0 %v131, 96
    %v213 = vpop.permute.xlu0 %212
    %v214 = vsel %vm52, %v131, 0
    %v216 = vsel %vm52, %v213, 0
    %218 = vmatprep.subr.mxu0 0.0
    %219 = vmatpush1.xpose.msra.mxu0 %v216
    %220 = vmatprep.subr.mxu0 0.0
    %221 = vmatpush1.xpose.msra.mxu0 0.0
    %222 = vmatprep.subr.mxu0 0.0
    %223 = vmatpush1.xpose.msra.mxu0 0.0
    %224 = vmatprep.subr.mxu0 0.0
    %225 = vmatpush1.xpose.msra.mxu0 0.0
    %226 = vmatprep.subr.mxu0 0.0
    %227 = vmatpush1.xpose.msra.mxu0 0.0
    %228 = vmatprep.subr.mxu0 0.0
    %229 = vmatpush1.xpose.msra.mxu0 0.0
    %230 = vmatprep.subr.mxu0 0.0
    %231 = vmatpush1.xpose.msra.mxu0 0.0
    %232 = vmatprep.subr.mxu0 0.0
    %233 = vmatpush1.xpose.msra.mxu0 0.0
    %234 = vmatprep.subr.mxu0 0.0
    %235 = vmatpush1.xpose.msra.mxu0 0.0
    %236 = vmatprep.subr.mxu0 0.0
    %237 = vmatpush1.xpose.msra.mxu0 0.0
    %238 = vmatprep.subr.mxu0 0.0
    %239 = vmatpush1.xpose.msra.mxu0 0.0
    %240 = vmatprep.subr.mxu0 0.0
    %241 = vmatpush1.xpose.msra.mxu0 0.0
    %242 = vmatprep.subr.mxu0 0.0
    %243 = vmatpush1.xpose.msra.mxu0 0.0
    %244 = vmatprep.subr.mxu0 0.0
    %245 = vmatpush1.xpose.msra.mxu0 0.0
    %246 = vmatprep.subr.mxu0 0.0
    %247 = vmatpush1.xpose.msra.mxu0 0.0
    %248 = vmatprep.subr.mxu0 0.0
    %249 = vmatpush1.xpose.msra.mxu0 0.0
    %250 = vmatprep.subr.mxu0 0.0
    %251 = vmatpush1.xpose.msra.mxu0 0.0
    %252 = vmatprep.subr.mxu0 0.0
    %253 = vmatpush1.xpose.msra.mxu0 0.0
    %254 = vmatprep.subr.mxu0 0.0
    %255 = vmatpush1.xpose.msra.mxu0 0.0
    %256 = vmatprep.subr.mxu0 0.0
    %257 = vmatpush1.xpose.msra.mxu0 0.0
    %258 = vmatprep.subr.mxu0 0.0
    %259 = vmatpush1.xpose.msra.mxu0 0.0
    %260 = vmatprep.subr.mxu0 0.0
    %261 = vmatpush1.xpose.msra.mxu0 0.0
    %262 = vmatprep.subr.mxu0 0.0
    %263 = vmatpush1.xpose.msra.mxu0 0.0
    %264 = vmatprep.subr.mxu0 0.0
    %265 = vmatpush1.xpose.msra.mxu0 0.0
    %266 = vmatprep.subr.mxu0 0.0
    %267 = vmatpush1.xpose.msra.mxu0 0.0
    %268 = vmatprep.subr.mxu0 0.0
    %269 = vmatpush1.xpose.msra.mxu0 0.0
    %270 = vmatprep.subr.mxu0 0.0
    %271 = vmatpush1.xpose.msra.mxu0 0.0
    %272 = vmatprep.subr.mxu0 0.0
    %273 = vmatpush1.xpose.msra.mxu0 0.0
    %274 = vmatprep.subr.mxu0 0.0
    %275 = vmatpush1.xpose.msra.mxu0 0.0
    %276 = vmatprep.subr.mxu0 0.0
    %277 = vmatpush1.xpose.msra.mxu0 0.0
    %278 = vmatprep.subr.mxu0 0.0
    %279 = vmatpush1.xpose.msra.mxu0 0.0
    %280 = vmatprep.subr.mxu0 0.0
    %281 = vmatpush1.xpose.msra.mxu0 0.0
    %282 = vmatprep.mubr.f32.mxu0 0.0
    %283 = vmatmul.mubr.f32.gmra.mrb[0].mxu0 %v214
    %v284 = vpop.f32.mrb[0].mxu0
    %v285 = vadd.f32 0.0, %v284
    %v286 = vpop.f32.mrb[0].mxu0
    %287 = vdwg.mxu0
    %vm288 = vcmask 64512
    %v289 = vsel %vm288, %v208, -inf
    %290 = vmax.xlane.f32.xlu0 %v289
    %v291 = vpop.xlane.xlu0 %290
    %v292 = vsel %vm288, %v285, -inf
    %293 = vmax.xlane.f32.xlu0 %v292
    %v294 = vpop.xlane.xlu0 %293
    %v295 = vmul.f32 %v291, 0.17677669
    %v296 = vmul.f32 %v294, 0.17677669
    %v297 = vtanh.pop %v295
    %v298 = vtanh.pop %v296
    %v299 = vmul.f32 %v297, 10.0
    %v300 = vmul.f32 %v298, 10.0
    %v301 = vlaneseq
    %v302 = vand.u32 %v301, 127
    %v303 = vld [vmem:[%s2] sm:$0x3]
    %304 = vset.pattern.permute.xlu0 0
    %305 = vperm.xlu0 %304, %v303
    %v306 = vpop.permute.xlu0 %305
    %vm307 = vcmp.eq.s32.totalorder %v302, %v306
    %v310 = vlaneseq
    %v311 = vshrl.u32 %v310, 7
    %v312 = vsub.s32 %v302, %v311
    %v313 = vrot.slane %v299, %v312
    %v314 = vlaneseq
    %v315 = vshrl.u32 %v314, 7
    %v316 = vsub.s32 %v302, %v315
    %v317 = vrot.slane %v300, %v316
    %vm318 = vcmask 1041409
    %v319 = vsel %vm318, %v317, %v313
    %v321 = vsel %vm307, -inf, %v319
    %vm322 = vcmask 58368
    %v323 = vsel %vm322, %v321, -inf
    %324 = vmax.xlane.f32.xlu0 %v323
    %v325 = vpop.xlane.xlu0 %324
    %v326 = vsub.f32 %v321, %v325
    %v327 = vmul.f32 %v326, 1.442695
    %v328 = vpow.pop %v327
    %v329 = vsel %vm322, %v328, 0.0
    %330 = vadd.xlane.f32.xlu0 %v329
    %v331 = vpop.xlane.xlu0 %330
    %v332 = vlog2.pop %v331
    %v333 = vmul.f32 %v332, 0.6931472
    %v334 = vsub.f32 %v326, %v333
    %335 = vst.msk [vmem:[#allocation7] sm:$0x3] %vm322, %v334
    %v336 = vmul.f32 %v334, 1.442695
    %v337 = vpow.pop %v336
    %338 = vst.msk [vmem:[#allocation8] sm:$0x3] %vm322, %v337
    // Predicated region
    $region22: #{tpu_custom_call.1} parent=1 // pred_check
      _
    $region23: #{tpu_custom_call.1} parent=1 // pred_check_branch
      %340 = sbr.rel (0) target = $region25
    $region24: #{tpu_custom_call.1} parent=1 // pred_region
      %s342 = ssub.s32 32, 32
      %343 = vsyncadd [#allocation4], %s342
      %s345 = sshll.u32 [#allocation7], 4
      %s346 = int_to_ptr.vmem [resolvable:$true] %s345
      %348 = dma.vmem_to_hbm [thread:$0]  %s346, 32, %s3, [#allocation4]
    $region25: #{tpu_custom_call.1} parent=1 // pred_fallthru
      _
    // Predicated region
    $region26: #{tpu_custom_call.1} parent=1 // pred_check
      _
    $region27: #{tpu_custom_call.1} parent=1 // pred_check_branch
      %350 = sbr.rel (0) target = $region29
    $region28: #{tpu_custom_call.1} parent=1 // pred_region
      %s352 = ssub.s32 32, 32
      %353 = vsyncadd [#allocation9], %s352
      %s355 = sshll.u32 [#allocation8], 4
      %s356 = int_to_ptr.vmem [resolvable:$true] %s355
      %358 = dma.vmem_to_hbm [thread:$0]  %s356, 32, %s4, [#allocation9]
    $region29: #{tpu_custom_call.1} parent=1 // pred_fallthru
      _
    // Predicated region
    $region30: #{tpu_custom_call.1} parent=1 // pred_check
      _
    $region31: #{tpu_custom_call.1} parent=1 // pred_check_branch
      %360 = sbr.rel (0) target = $region33
    $region32: #{tpu_custom_call.1} parent=1 // pred_region
      %361 = dma.done [#allocation4], 32
    $region33: #{tpu_custom_call.1} parent=1 // pred_fallthru
      _
    // Predicated region
    $region34: #{tpu_custom_call.1} parent=1 // pred_check
      _
    $region35: #{tpu_custom_call.1} parent=1 // pred_check_branch
      %363 = sbr.rel (0) target = $region37
    $region36: #{tpu_custom_call.1} parent=1 // pred_region
      %364 = dma.done [#allocation9], 32
    $region37: #{tpu_custom_call.1} parent=1 // pred_fallthru
      _
    %365 = vsyncpa [#allocation3], 1
    %366 = vsyncpa [#allocation6], 1
    %367 = vsyncpa [#allocation4], 1
    %368 = vsyncpa [#allocation9], 1

</llo_original>
